<compile_context>
chip_gen: v5e
topology: v5e:2x2
jax: 0.10.0
libtpu: 0.0.40
codegen_flags: <defaults>
</compile_context>

<pallas_src>
import math
import jax
import jax.numpy as jnp
from jax.experimental import pallas as pl
from jax.experimental.pallas import tpu as pltpu

# ----- static module hyper-parameters (PyTorch __init__ defaults) -----
IN_DIM = 16          # input_dim of the module
HIDDEN = 32          # fc maps input_dim -> 32
OUTPUT_DIM = 2
NUM_GAUSSIANS = 2
NUM_HEADS = 1

HG = NUM_HEADS * NUM_GAUSSIANS          # pi width
HGO = HG * OUTPUT_DIM                   # sigma / mu width
TOT = HG + 2 * HGO                      # fused output width (= 10)


def _round_up(x, m):
    return ((x + m - 1) // m) * m


def _mog_kernel(x_ref, w_ref, b_ref, out_ref):
    """One batch tile, batch on lanes.

    x_ref : (IN_DIM, tb)  transposed inputs
    w_ref : (TOT, IN_DIM) collapsed network weights (transposed)
    b_ref : (TOT, 1)      collapsed bias
    out   : (TOT, tb)     [pi | sigma | mu] rows, batch on lanes
    """
    # MXU: N dimension == tb (lane-dense); K = 16 fixed by the problem.
    y = jnp.dot(w_ref[...], x_ref[...],
                preferred_element_type=jnp.float32) + b_ref[...]        # (TOT, tb)

    row = jax.lax.broadcasted_iota(jnp.int32, y.shape, 0)               # sublane index

    # ---- sigma rows [HG, HG+HGO): exp(logits) + eps.  ELU of a positive value
    #      is the identity, so the reference's ELU(exp(.)) collapses to exp(.).
    #      exp is applied to the full slab (EUP slot is otherwise idle) and
    #      selected only where it belongs -> no sublane shuffles.
    out = jnp.where((row >= HG) & (row < HG + HGO), jnp.exp(y) + 1e-15, y)

    # ---- pi rows [0, HG): per-head softmax over the gaussian axis ----
    for hd in range(NUM_HEADS):                     # static unroll, tiny
        base = hd * NUM_GAUSSIANS
        if NUM_GAUSSIANS == 2:
            # Exact 2-way softmax via sigmoid of the logit difference.
            p0 = jax.nn.sigmoid(y[base:base + 1, :] - y[base + 1:base + 2, :])
            out = jnp.where(row == base, p0, out)
            out = jnp.where(row == base + 1, 1.0 - p0, out)
        else:
            # Generic (untested with defaults): stable softmax over the
            # NUM_GAUSSIANS sublanes of this head.
            logits = y[base:base + NUM_GAUSSIANS, :]
            m = jnp.max(logits, axis=0, keepdims=True)
            e = jnp.exp(logits - m)
            p = e / jnp.sum(e, axis=0, keepdims=True)
            out = jax.lax.dynamic_update_slice(out, p, (base, 0))

    # ---- mu rows [HG+HGO, TOT): plain linear, already in `out` ----
    out_ref[...] = out                              # one dense, lane-full store


def mog_decoder_forward(x, params, *, block_rows=16384):
    """x = (concat_embed, contrastive_loss); returns (pi, mu, sigma)."""
    concat_embed, _contrastive_loss = x   # contrastive_loss is stashed by the module, unused in fwd
    B = concat_embed.shape[0]

    # Fold fc + three heads into one weight/bias (eval mode, no nonlinearity between).
    w_heads = jnp.concatenate(
        [params["w_pi"], params["w_sigma"], params["w_mu"]], axis=1)      # (HIDDEN, TOT)
    b_heads = jnp.concatenate(
        [params["b_pi"], params["b_sigma"], params["b_mu"]], axis=1)      # (1, TOT)
    w_comb_t = (params["w_fc"] @ w_heads).T                               # (TOT, IN_DIM)
    b_comb_t = (params["b_fc"] @ w_heads + b_heads).T                     # (TOT, 1)

    # Batch lives on the lane axis: tile must be a multiple of 128 lanes.
    # Aim for ~8 grid steps on large batches (feeds both v7x cores), capped at
    # block_rows; always at least one full 128-lane tile.
    b_lane = _round_up(max(B, 1), 128)
    tb = min(block_rows, max(128, _round_up(-(-b_lane // 8), 128)))
    b_pad = _round_up(b_lane, tb)

    x_t = concat_embed.T                                                  # (IN_DIM, B)
    if b_pad != B:
        x_t = jnp.pad(x_t, ((0, 0), (0, b_pad - B)))

    cost = pl.CostEstimate(
        flops=2 * b_pad * IN_DIM * TOT,
        transcendentals=b_pad * (TOT + NUM_HEADS),   # slab-wide exp + per-head sigmoid
        bytes_accessed=4 * b_pad * (IN_DIM + TOT),
    )

    out = pl.pallas_call(
        _mog_kernel,
        out_shape=jax.ShapeDtypeStruct((TOT, b_pad), jnp.float32),
        grid=(b_pad // tb,),
        in_specs=[
            pl.BlockSpec((IN_DIM, tb), lambda i: (0, i)),     # transposed input tile
            pl.BlockSpec((TOT, IN_DIM), lambda i: (0, 0)),    # fused weights (resident)
            pl.BlockSpec((TOT, 1), lambda i: (0, 0)),         # fused bias (resident)
        ],
        out_specs=pl.BlockSpec((TOT, tb), lambda i: (0, i)),  # lane-dense output slab
        compiler_params=pltpu.CompilerParams(
            dimension_semantics=("parallel",)),
        cost_estimate=cost,
    )(x_t, w_comb_t, b_comb_t)

    out = out[:, :B]
    pi = out[:HG].T.reshape(B, NUM_HEADS, NUM_GAUSSIANS)
    sigma = out[HG:HG + HGO].T.reshape(B, NUM_HEADS, NUM_GAUSSIANS, OUTPUT_DIM)
    mu = out[HG + HGO:].T.reshape(B, NUM_HEADS, NUM_GAUSSIANS, OUTPUT_DIM)
    return pi, mu, sigma


def init_params(key):
    """Deterministic init matching the PyTorch module's init scheme.
    Weights stored as (in_features, out_features) == PyTorch W^T; biases as (1, out)."""
    k_fc_w, k_fc_b, k_pi, k_sig, k_mu = jax.random.split(key, 5)

    bound_fc = 1.0 / math.sqrt(IN_DIM)      # default nn.Linear init
    w_fc = jax.random.uniform(k_fc_w, (IN_DIM, HIDDEN), jnp.float32,
                              -bound_fc, bound_fc)
    b_fc = jax.random.uniform(k_fc_b, (1, HIDDEN), jnp.float32,
                              -bound_fc, bound_fc)

    # pi: xavier_uniform weight, zero bias
    bound_pi = math.sqrt(6.0 / (HIDDEN + HG))
    w_pi = jax.random.uniform(k_pi, (HIDDEN, HG), jnp.float32,
                              -bound_pi, bound_pi)
    b_pi = jnp.zeros((1, HG), jnp.float32)

    # sigma / mu: xavier_normal weight, zero bias
    std_s = math.sqrt(2.0 / (HIDDEN + HGO))
    w_sigma = std_s * jax.random.normal(k_sig, (HIDDEN, HGO), jnp.float32)
    b_sigma = jnp.zeros((1, HGO), jnp.float32)
    w_mu = std_s * jax.random.normal(k_mu, (HIDDEN, HGO), jnp.float32)
    b_mu = jnp.zeros((1, HGO), jnp.float32)

    return dict(w_fc=w_fc, b_fc=b_fc, w_pi=w_pi, b_pi=b_pi,
                w_sigma=w_sigma, b_sigma=b_sigma, w_mu=w_mu, b_mu=b_mu)


def _reference_forward(x, params):
    """Pure-JAX reference matching the PyTorch forward (eval mode)."""
    concat_embed, _ = x
    B = concat_embed.shape[0]
    h = concat_embed @ params["w_fc"] + params["b_fc"]
    pi = jax.nn.softmax(
        (h @ params["w_pi"] + params["b_pi"]).reshape(B, NUM_HEADS, NUM_GAUSSIANS),
        axis=-1)
    sigma = jnp.exp(h @ params["w_sigma"] + params["b_sigma"])
    sigma = jax.nn.elu(sigma) + 1e-15
    sigma = sigma.reshape(B, NUM_HEADS, NUM_GAUSSIANS, OUTPUT_DIM)
    mu = (h @ params["w_mu"] + params["b_mu"]).reshape(
        B, NUM_HEADS, NUM_GAUSSIANS, OUTPUT_DIM)
    return pi, mu, sigma


if __name__ == "__main__":
    key = jax.random.PRNGKey(0)
    k_params, k_x = jax.random.split(key)

    params = init_params(k_params)

    B = 4
    concat_embed = jax.random.normal(k_x, (B, IN_DIM), jnp.float32)
    contrastive_loss = jnp.float32(0.37)   # passed through, unused in forward output

    pi, mu, sigma = mog_decoder_forward((concat_embed, contrastive_loss), params)
    jax.block_until_ready((pi, mu, sigma))

    # shape checks
    assert pi.shape == (B, NUM_HEADS, NUM_GAUSSIANS)
    assert mu.shape == (B, NUM_HEADS, NUM_GAUSSIANS, OUTPUT_DIM)
    assert sigma.shape == (B, NUM_HEADS, NUM_GAUSSIANS, OUTPUT_DIM)

    # numerical checks vs pure-JAX reference (exact sigmoid softmax; only the
    # fused-weight reassociation perturbs values -> tight tolerances)
    pi_r, mu_r, sigma_r = _reference_forward((concat_embed, contrastive_loss), params)
    assert jnp.allclose(jnp.sum(pi, axis=-1), 1.0, atol=1e-6)
    assert bool(jnp.all(sigma > 0))
    assert jnp.allclose(pi, pi_r, rtol=1e-4, atol=1e-5)
    assert jnp.allclose(mu, mu_r, rtol=1e-4, atol=1e-5)
    assert jnp.allclose(sigma, sigma_r, rtol=1e-4, atol=1e-5)

    print("KERNEL_OK")
</pallas_src>

<mosaic_0001>
module attributes {stable_mosaic.version = 11 : i64} {
  func.func @_mog_kernel(%arg0: i32, %arg1: memref<16x128xf32, #tpu.memory_space<vmem>>, %arg2: memref<10x16xf32, #tpu.memory_space<vmem>>, %arg3: memref<10x1xf32, #tpu.memory_space<vmem>>, %arg4: memref<10x128xf32, #tpu.memory_space<vmem>>) attributes {dimension_semantics = [#tpu.dimension_semantics<parallel>], iteration_bounds = array<i64: 1>, scalar_prefetch = 0 : i64, scratch_operands = 0 : i64, tpu.core_type = #tpu.core_type<tc>, window_params = [{transform_indices = @transform_0, window_bounds = array<i64: 16, 128>}, {pipeline_mode = #tpu.pipeline_mode<synchronous>, transform_indices = @transform_1, window_bounds = array<i64: 10, 16>}, {pipeline_mode = #tpu.pipeline_mode<synchronous>, transform_indices = @transform_2, window_bounds = array<i64: 10, 1>}, {transform_indices = @transform_3, window_bounds = array<i64: 10, 128>}]} {
    %c0 = arith.constant 0 : index
    %c0_0 = arith.constant 0 : index
    %0 = vector.load %arg2[%c0, %c0_0] : memref<10x16xf32, #tpu.memory_space<vmem>>, vector<10x16xf32>
    %c0_1 = arith.constant 0 : index
    %c0_2 = arith.constant 0 : index
    %1 = vector.load %arg1[%c0_1, %c0_2] : memref<16x128xf32, #tpu.memory_space<vmem>>, vector<16x128xf32>
    %cst = arith.constant dense<0.000000e+00> : vector<10x128xf32>
    %2 = tpu.matmul %0, %1, %cst {dimension_numbers = #tpu.dot_dimension_numbers<[1], [0], [0], [1], [0, 0, 1, 1], [], []>} : vector<10x16xf32>, vector<16x128xf32>, vector<10x128xf32> -> vector<10x128xf32>
    %c0_3 = arith.constant 0 : index
    %c0_4 = arith.constant 0 : index
    %3 = vector.load %arg3[%c0_3, %c0_4] : memref<10x1xf32, #tpu.memory_space<vmem>>, vector<10x1xf32>
    %4 = vector.broadcast %3 : vector<10x1xf32> to vector<10x128xf32>
    %5 = arith.addf %2, %4 : vector<10x128xf32>
    %6 = tpu.iota {dimensions = array<i32: 0>} : vector<10x128xi32>
    %c2_i32 = arith.constant 2 : i32
    %7 = vector.broadcast %c2_i32 : i32 to vector<10x128xi32>
    %8 = arith.cmpi sge, %6, %7 : vector<10x128xi32>
    %c6_i32 = arith.constant 6 : i32
    %9 = vector.broadcast %c6_i32 : i32 to vector<10x128xi32>
    %10 = arith.cmpi slt, %6, %9 : vector<10x128xi32>
    %11 = arith.andi %8, %10 : vector<10x128xi1>
    %12 = math.exp %5 : vector<10x128xf32>
    %cst_5 = arith.constant 1.000000e-15 : f32
    %13 = vector.broadcast %cst_5 : f32 to vector<10x128xf32>
    %14 = arith.addf %12, %13 : vector<10x128xf32>
    %15 = arith.select %11, %14, %5 : vector<10x128xi1>, vector<10x128xf32>
    %16 = vector.extract_strided_slice %5 {offsets = [0, 0], sizes = [1, 128], strides = [1, 1]} : vector<10x128xf32> to vector<1x128xf32>
    %17 = vector.extract_strided_slice %5 {offsets = [1, 0], sizes = [1, 128], strides = [1, 1]} : vector<10x128xf32> to vector<1x128xf32>
    %18 = arith.subf %16, %17 : vector<1x128xf32>
    %19 = arith.negf %18 : vector<1x128xf32>
    %20 = math.exp %19 : vector<1x128xf32>
    %cst_6 = arith.constant 1.000000e+00 : f32
    %21 = vector.broadcast %cst_6 : f32 to vector<1x128xf32>
    %22 = arith.addf %21, %20 : vector<1x128xf32>
    %23 = arith.divf %21, %22 : vector<1x128xf32>
    %c0_i32 = arith.constant 0 : i32
    %24 = vector.broadcast %c0_i32 : i32 to vector<10x128xi32>
    %25 = arith.cmpi eq, %6, %24 : vector<10x128xi32>
    %26 = vector.shape_cast %23 : vector<1x128xf32> to vector<1x128xf32>
    %27 = vector.broadcast %26 : vector<1x128xf32> to vector<10x128xf32>
    %28 = arith.select %25, %27, %15 : vector<10x128xi1>, vector<10x128xf32>
    %c1_i32 = arith.constant 1 : i32
    %29 = vector.broadcast %c1_i32 : i32 to vector<10x128xi32>
    %30 = arith.cmpi eq, %6, %29 : vector<10x128xi32>
    %cst_7 = arith.constant 1.000000e+00 : f32
    %31 = vector.broadcast %cst_7 : f32 to vector<1x128xf32>
    %32 = arith.subf %31, %23 : vector<1x128xf32>
    %33 = vector.shape_cast %32 : vector<1x128xf32> to vector<1x128xf32>
    %34 = vector.broadcast %33 : vector<1x128xf32> to vector<10x128xf32>
    %35 = arith.select %30, %34, %28 : vector<10x128xi1>, vector<10x128xf32>
    %c0_8 = arith.constant 0 : index
    %c0_9 = arith.constant 0 : index
    %36 = vector.load %arg4[%c0_8, %c0_9] : memref<10x128xf32, #tpu.memory_space<vmem>>, vector<10x128xf32>
    tpu.vector_store %arg4[%c0_8, %c0_9], %35 {strides = array<i32>} : memref<10x128xf32, #tpu.memory_space<vmem>>, vector<10x128xf32>,
    return
  }
  func.func @transform_0(%arg0: i32) -> (i32, i32) {
    %c0_i32 = arith.constant 0 : i32
    %c0_i32_0 = arith.constant 0 : i32
    return %c0_i32, %arg0 : i32, i32
  }
  func.func @transform_1(%arg0: i32) -> (i32, i32) {
    %c0_i32 = arith.constant 0 : i32
    %c0_i32_0 = arith.constant 0 : i32
    %c0_i32_1 = arith.constant 0 : i32
    return %c0_i32, %c0_i32_0 : i32, i32
  }
  func.func @transform_2(%arg0: i32) -> (i32, i32) {
    %c0_i32 = arith.constant 0 : i32
    %c0_i32_0 = arith.constant 0 : i32
    %c0_i32_1 = arith.constant 0 : i32
    return %c0_i32, %c0_i32_0 : i32, i32
  }
  func.func @transform_3(%arg0: i32) -> (i32, i32) {
    %c0_i32 = arith.constant 0 : i32
    %c0_i32_0 = arith.constant 0 : i32
    return %c0_i32, %arg0 : i32, i32
  }
}

</mosaic_0001>

<llo_original>
// kernel: tpu_custom_call.1
$region0: #{tpu_custom_call.1}
  #allocation0 [shape = 'u32[]', space=smem, size = 0x4, offset = 0x4, fixed_abs, tag = 'smem constant byte address 0x4 - core index']
  #allocation1 [shape = 'u32[72,128]{1,0:T(1,128)}', space=vmem, size = 0x9000, scoped, tag = 'internal scratch']
  %s0 = inlined_call_operand.vmem [shape: f32[16,128], index: 0, kind: input, shape index: {}]
  %s1 = inlined_call_operand.hbm [shape: f32[10,16], index: 1, kind: input, shape index: {}]
  %s2 = inlined_call_operand.vmem [shape: f32[10,1], index: 2, kind: input, shape index: {}]
  %s3 = inlined_call_operand.hbm [shape: f32[10,128], index: 3, kind: output, shape index: {}]
  %s4 = sld [smem:[#allocation0]]
  $region26: #{tpu_custom_call.1} parent=0
    _
  %s6 = ssub.s32 1, %s4
  %s7 = scalar_select 0, %s6, %s4
  $region1: #{tpu_custom_call.1} parent=0
    #allocation2 [shape = 'u8[8192]{0}', space=vmem, size = 0x2000, scoped, tag = 'input window, operand 1, single buffered']
    #allocation3 [shape = 's32[1]{0}', space=sflag, size = 0x4, scoped, tag = 'scoped memory for tpu_custom_call.1']
    #allocation4 [shape = 's32[1]{0}', space=sflag, size = 0x4, scoped, tag = 'scoped memory for tpu_custom_call.1']
    #allocation5 [shape = 'u8[8192]{0}', space=vmem, size = 0x2000, scoped, tag = 'output window, operand 0, single buffered']
    %8 = vsyncpa [#allocation3], 0
    %9 = vsyncpa [#allocation4], 0
    // Predicated region
    $region2: #{tpu_custom_call.1} parent=1 // pred_check
      _
    $region3: #{tpu_custom_call.1} parent=1 // pred_check_branch
      %11 = sbr.rel (0) target = $region5
    $region4: #{tpu_custom_call.1} parent=1 // pred_region
      _
    $region5: #{tpu_custom_call.1} parent=1 // pred_fallthru
      _
    // Predicated region
    $region6: #{tpu_custom_call.1} parent=1 // pred_check
      _
    $region7: #{tpu_custom_call.1} parent=1 // pred_check_branch
      %13 = sbr.rel (0) target = $region9
    $region8: #{tpu_custom_call.1} parent=1 // pred_region
      %15 = vsyncadd [#allocation3], 0
      %s16 = sshll.u32 %s1, 4
      %s17 = int_to_ptr.hbm [resolvable:$true] %s16
      %s18 = sshll.u32 [#allocation2], 4
      %s19 = int_to_ptr.vmem [resolvable:$true] %s18
      %24 = dma.hbm_to_vmem [thread:$0]  %s17, 256, %s19, [#allocation3], 128, 128, 8
    $region9: #{tpu_custom_call.1} parent=1 // pred_fallthru
      _
    // Predicated region
    $region10: #{tpu_custom_call.1} parent=1 // pred_check
      _
    $region11: #{tpu_custom_call.1} parent=1 // pred_check_branch
      %26 = sbr.rel (0) target = $region13
    $region12: #{tpu_custom_call.1} parent=1 // pred_region
      _
    $region13: #{tpu_custom_call.1} parent=1 // pred_fallthru
      _
    // Predicated region
    $region14: #{tpu_custom_call.1} parent=1 // pred_check
      _
    $region15: #{tpu_custom_call.1} parent=1 // pred_check_branch
      %28 = sbr.rel (0) target = $region17
    $region16: #{tpu_custom_call.1} parent=1 // pred_region
      %30 = dma.done [#allocation3], 256
    $region17: #{tpu_custom_call.1} parent=1 // pred_fallthru
      _
    %v31 = vld [vmem:[#allocation2] sm:$0xff]
    %v32 = vld [vmem:[#allocation2 + $0x8] sm:$0x3]
    %v33 = vld [vmem:[%s0] sm:$0xff]
    %v34 = vld [vmem:[%s0 + $0x8] sm:$0xff]
    %v35 = vld [vmem:[%s2] sm:$0xff]
    %v36 = vld [vmem:[%s2 + $0x8] sm:$0x3]
    %38 = vset.pattern.permute.xlu0 0
    %39 = vperm.xlu0 %38, %v35
    %v40 = vpop.permute.xlu0 %39
    %43 = vset.pattern.permute.xlu0 0
    %44 = vperm.xlu0 %43, %v36
    %v45 = vpop.permute.xlu0 %44
    %vm47 = vcmask 130048
    %v49 = vsel %vm47, %v31, 0
    %v52 = vsel %vm47, %v32, 0
    %54 = vmatpush.msra.mxu0 0.0
    %55 = vmatpush.msra.mxu0 0.0
    %56 = vmatpush.msra.mxu0 0.0
    %57 = vmatpush.msra.mxu0 0.0
    %58 = vmatpush.msra.mxu0 0.0
    %59 = vmatpush.msra.mxu0 0.0
    %60 = vmatpush.msra.mxu0 0.0
    %61 = vmatpush.msra.mxu0 0.0
    %62 = vmatpush.msra.mxu0 0.0
    %63 = vmatpush.msra.mxu0 0.0
    %64 = vmatpush.msra.mxu0 0.0
    %65 = vmatpush.msra.mxu0 0.0
    %66 = vmatpush.msra.mxu0 0.0
    %67 = vmatpush.msra.mxu0 0.0
    %68 = vmatpush.msra.mxu0 %v34
    %69 = vmatpush.msra.mxu0 %v33
    %70 = vmatmul.f32.gmra.mxu0 %v49
    %v71 = vpop.f32.mrf.mxu0
    %v72 = vadd.f32 %v40, %v71
    %73 = vmatmul.f32.gmra.mxu0 %v52
    %v74 = vpop.f32.mrf.mxu0
    %v75 = vadd.f32 %v45, %v74
    %76 = vdwg.mxu0
    %v77 = vlaneseq
    %v78 = vshrl.u32 %v77, 7
    %v79 = vadd.s32 %v78, 8
    %vm80 = vcmp.ge.s32.totalorder %v78, 2
    %vm81 = vcmp.ge.s32.totalorder %v79, 2
    %vm82 = vcmp.lt.s32.totalorder %v78, 6
    %vm83 = vcmp.lt.s32.totalorder %v79, 6
    %vm84 = vmand %vm80, %vm82
    %vm85 = vmand %vm81, %vm83
    %v86 = vmul.f32 %v72, 1.442695
    %v87 = vpow.pop %v86
    %v88 = vmul.f32 %v75, 1.442695
    %v89 = vpow.pop %v88
    %v90 = vadd.f32 %v87, 1e-15
    %v91 = vadd.f32 %v89, 1e-15
    %v92 = vsel %vm84, %v90, %v72
    %v93 = vsel %vm85, %v91, %v75
    %v95 = vrot.slane %v72, 1
    %v97 = vsub.f32 %v72, %v95
    %v98 = vxor.u32 %v97, 2147483648
    %v99 = vmul.f32 %v98, 1.442695
    %v100 = vpow.pop %v99
    %v101 = vadd.f32 %v100, 1.0
    %v102 = vrcp.pop %v101
    %v103 = vmul.f32 %v101, %v102
    %v104 = vsub.f32 1.0, %v103
    %v105 = vmul.f32 %v102, %v104
    %v106 = vadd.f32 %v102, %v105
    %vm107 = vweird.f32 %v101
    %vm108 = vweird.f32 %v102
    %vm109 = vmor %vm107, %vm108
    %v110 = vsel %vm109, %v102, %v106
    %v111 = vand.u32 2147483647, %v101
    %vm112 = vcmp.eq.f32.partialorder %v111, 8.507059e+37
    %v113 = vand.u32 %v101, 2147483648
    %v114 = vor.u32 1.1754944e-38, %v113
    %v115 = vsel %vm112, %v114, %v110
    %v116 = vmul.f32 1.0, %v115
    %vm117 = vcmp.eq.s32.totalorder %v78, 0
    %vm118 = vcmp.eq.s32.totalorder %v79, 0
    %v119 = vperm.slane %v116, 0
    %v120 = vsel %vm117, %v119, %v92
    %v121 = vsel %vm118, %v119, %v93
    %vm122 = vcmp.eq.s32.totalorder %v78, 1
    %vm123 = vcmp.eq.s32.totalorder %v79, 1
    %v124 = vsub.f32 1.0, %v116
    %v125 = vperm.slane %v124, 0
    %v126 = vsel %vm122, %v125, %v120
    %v127 = vsel %vm123, %v125, %v121
    %128 = vst [vmem:[#allocation5] sm:$0xff] %v126
    %129 = vst [vmem:[#allocation5 + $0x8] sm:$0x3] %v127
    // Predicated region
    $region18: #{tpu_custom_call.1} parent=1 // pred_check
      _
    $region19: #{tpu_custom_call.1} parent=1 // pred_check_branch
      %131 = sbr.rel (0) target = $region21
    $region20: #{tpu_custom_call.1} parent=1 // pred_region
      %133 = vsyncadd [#allocation4], 0
      %s134 = sshll.u32 [#allocation5], 4
      %s135 = int_to_ptr.vmem [resolvable:$true] %s134
      %s136 = sshll.u32 %s3, 4
      %s137 = int_to_ptr.hbm [resolvable:$true] %s136
      %142 = dma.vmem_to_hbm [thread:$0]  %s135, 256, %s137, [#allocation4], 128, 128, 8
    $region21: #{tpu_custom_call.1} parent=1 // pred_fallthru
      _
    // Predicated region
    $region22: #{tpu_custom_call.1} parent=1 // pred_check
      _
    $region23: #{tpu_custom_call.1} parent=1 // pred_check_branch
      %144 = sbr.rel (0) target = $region25
    $region24: #{tpu_custom_call.1} parent=1 // pred_region
      %146 = dma.done [#allocation4], 256
    $region25: #{tpu_custom_call.1} parent=1 // pred_fallthru
      _
    %147 = vsyncpa [#allocation3], 1
    %148 = vsyncpa [#allocation4], 1

</llo_original>
